<compile_context>
chip_gen: v7x
topology: tpu7x:2x2x1
jax: 0.10.0
libtpu: 0.0.40
codegen_flags: <defaults>
</compile_context>

<pallas_src>
import functools
import math

import jax
import jax.numpy as jnp
import numpy as np
from jax import lax
from jax.experimental import pallas as pl
from jax.experimental.pallas import tpu as pltpu

TEMPERATURE = 0.1
BASE_TEMPERATURE = 0.1


def _round_up(x: int, m: int) -> int:
    return ((x + m - 1) // m) * m


def _vmem_budget_bytes() -> int:
    """Per-core VMEM budget with headroom; v7x-safe fallback."""
    try:
        cap = int(pltpu.get_tpu_info().vmem_capacity_bytes)
    except Exception:
        cap = 64 * 1024 * 1024          # conservative: v7x per-TensorCore VMEM
    return max(32 * 1024 * 1024, (cap * 3) // 4)


# ----------------------------------------------------------------------------
# Kernels: row-wise logsumexp of (frow . fall^T) * (1/T)
# ----------------------------------------------------------------------------
def _lse_single_kernel(b_actual, inv_temp, needs_col_mask,
                       frow_ref, fall_ref, out_ref):
    """Single column tile: all contrast rows resident in VMEM, one pass."""
    # Gram tile without forming fall.T (contract dim 1 of both operands), f32
    # accumulate on the MXU; 1/T applied to the f32 output (bf16-safe).
    sim = lax.dot_general(frow_ref[...], fall_ref[...],
                          (((1,), (1,)), ((), ())),
                          preferred_element_type=jnp.float32) * inv_temp
    if needs_col_mask:
        col_ids = lax.broadcasted_iota(jnp.int32, (1, sim.shape[1]), 1)
        sim = jnp.where(col_ids < b_actual, sim, -jnp.inf)   # padded cols out
    m = jnp.max(sim, axis=1, keepdims=True)
    out_ref[...] = m + jnp.log(jnp.sum(jnp.exp(sim - m), axis=1, keepdims=True))


def _lse_online_kernel(b_actual, block_n, inv_temp, needs_col_mask,
                       frow_ref, fcol_ref, out_ref, m_sc, l_sc):
    """Online-softmax fallback when the full batch doesn't fit one column tile."""
    j = pl.program_id(1)

    @pl.when(j == 0)
    def _init():
        m_sc[...] = jnp.full(m_sc.shape, -jnp.inf, jnp.float32)
        l_sc[...] = jnp.zeros(l_sc.shape, jnp.float32)

    sim = lax.dot_general(frow_ref[...], fcol_ref[...],
                          (((1,), (1,)), ((), ())),
                          preferred_element_type=jnp.float32) * inv_temp
    if needs_col_mask:
        col_ids = j * block_n + lax.broadcasted_iota(jnp.int32, (1, block_n), 1)
        sim = jnp.where(col_ids < b_actual, sim, -jnp.inf)

    m_prev = m_sc[...]
    m_new = jnp.maximum(m_prev, jnp.max(sim, axis=1, keepdims=True))
    l_sc[...] = (jnp.exp(m_prev - m_new) * l_sc[...]
                 + jnp.sum(jnp.exp(sim - m_new), axis=1, keepdims=True))
    m_sc[...] = m_new

    @pl.when(j == pl.num_programs(1) - 1)
    def _finalize():
        out_ref[...] = m_sc[...] + jnp.log(l_sc[...])


# ----------------------------------------------------------------------------
# Wrapper
# ----------------------------------------------------------------------------
def supcon_loss(features, labels, groups=None, *,
                temperature=TEMPERATURE, base_temperature=BASE_TEMPERATURE,
                block_m=None, block_n=None, compute_dtype=jnp.bfloat16):
    """Supervised contrastive loss matching the PyTorch SupConLoss.forward."""
    feats = jnp.asarray(features)
    feats2d = feats.reshape(feats.shape[0], -1)
    b, d = feats2d.shape
    labels = jnp.asarray(labels).reshape(-1)
    if labels.shape[0] != b:
        raise ValueError("Num of labels or groups does not match num of features")
    if groups is not None and jnp.asarray(groups).reshape(-1).shape[0] != b:
        raise ValueError("Num of labels or groups does not match num of features")
    # TODO(synk): `groups` only participates in the length check in the original
    # forward (it never affects the loss) and `device` is placement-only, so
    # neither is used beyond this point.

    itemsize = jnp.dtype(compute_dtype).itemsize
    d_pad = _round_up(d, 128)
    budget = _vmem_budget_bytes()

    def vmem_est(bm, bn):
        # two double-buffered feature operands + (tiny) output / scratch
        return 2 * (bm + bn) * d_pad * itemsize + 32 * bm

    # ---- row tile ----------------------------------------------------------
    if block_m is None:
        if b <= 128:
            block_m = _round_up(b, 8)            # tiny batch: one row tile
        else:
            # >=2 row tiles so the "parallel" axis spans both v7x TensorCores,
            # tiles capped near 1024 rows; power-of-two batches give 256-aligned
            # tiles (fills the 256-wide v6e/v7x MXU) with no over-padding.
            n_row_tiles = max(2, -(-b // 1024))
            block_m = _round_up(-(-b // n_row_tiles), 8)
    if block_m % 8 != 0:
        raise ValueError("block_m must be a multiple of 8")
    b_pad = _round_up(b, block_m)

    # ---- column tile ---------------------------------------------------------
    if block_n is None:
        if vmem_est(block_m, b_pad) <= budget:
            block_n = b_pad                      # single column tile (default)
        else:
            # Online-softmax fallback for very large B*D footprints.
            # TODO(synk): the feature (K) dim is not tiled; a D that does not
            # fit VMEM even at 256-row tiles would need a K-tiled variant.
            if b > 256:
                block_m = 256
            block_n = min(b_pad, 256)
            b_pad = _round_up(b, max(block_m, block_n))
    if block_n % 8 != 0:
        raise ValueError("block_n must be a multiple of 8")
    if b_pad % block_n != 0:                     # only for user-specified mismatch
        b_pad = _round_up(b, math.lcm(block_m, block_n))

    grid_rows = b_pad // block_m
    grid_cols = b_pad // block_n
    needs_col_mask = b_pad != b
    vmem_limit = int(budget)
    inv_temp = float(1.0 / temperature)

    feats_p = jnp.pad(feats2d.astype(compute_dtype),
                      ((0, b_pad - b), (0, d_pad - d)))   # zero pad (safe in dot)

    if grid_cols == 1:
        kernel = functools.partial(_lse_single_kernel, b, inv_temp, needs_col_mask)
        log_z_pad = pl.pallas_call(
            kernel,
            out_shape=jax.ShapeDtypeStruct((b_pad, 1), jnp.float32),
            grid=(grid_rows,),
            in_specs=[
                pl.BlockSpec((block_m, d_pad), lambda i: (i, 0)),   # anchor rows
                pl.BlockSpec((b_pad, d_pad), lambda i: (0, 0)),     # all contrast rows
            ],
            out_specs=pl.BlockSpec((block_m, 1), lambda i: (i, 0)),
            compiler_params=pltpu.CompilerParams(
                dimension_semantics=("parallel",),
                vmem_limit_bytes=vmem_limit),
        )(feats_p, feats_p)
    else:
        kernel = functools.partial(_lse_online_kernel, b, block_n, inv_temp,
                                   needs_col_mask)
        log_z_pad = pl.pallas_call(
            kernel,
            out_shape=jax.ShapeDtypeStruct((b_pad, 1), jnp.float32),
            grid=(grid_rows, grid_cols),
            in_specs=[
                pl.BlockSpec((block_m, d_pad), lambda i, j: (i, 0)),
                pl.BlockSpec((block_n, d_pad), lambda i, j: (j, 0)),
            ],
            out_specs=pl.BlockSpec((block_m, 1), lambda i, j: (i, 0)),
            scratch_shapes=[pltpu.VMEM((block_m, 1), jnp.float32),   # running max
                            pltpu.VMEM((block_m, 1), jnp.float32)],  # running denom
            compiler_params=pltpu.CompilerParams(
                dimension_semantics=("parallel", "arbitrary"),
                vmem_limit_bytes=vmem_limit),
        )(feats_p, feats_p)

    log_z = log_z_pad[:b, 0]                     # drop padded rows

    # ---- pos-mask statistics, hoisted out of the kernel (O(B*D)) ------------
    feats_f32 = feats2d.astype(jnp.float32)
    labels_i32 = labels.astype(jnp.int32)
    # Dense class ids via sorted uniques (jit-friendly with a static size).
    # NOTE: assumes no real label equals int32 max (the padding sentinel).
    uniq = jnp.unique(labels_i32, size=b, fill_value=jnp.iinfo(jnp.int32).max)
    ids = jnp.searchsorted(uniq, labels_i32).astype(jnp.int32)
    pos_count = jax.ops.segment_sum(jnp.ones((b,), jnp.float32), ids,
                                    num_segments=b)[ids]                 # [b]
    class_sum = jax.ops.segment_sum(feats_f32, ids, num_segments=b)[ids]  # [b, d]
    pos_sim = jnp.sum(feats_f32 * class_sum, axis=1) * inv_temp           # [b]

    # mean_log_prob_pos_i = (sum_j pos*sim_ij)/pos_count_i - logsumexp_j(sim_ij)
    mean_log_prob_pos = pos_sim / pos_count - log_z     # pos_count >= 1 (diagonal)
    return -(temperature / base_temperature) * jnp.mean(mean_log_prob_pos)


# ----------------------------------------------------------------------------
# Pure-JAX reference mirroring the PyTorch code exactly (for validation).
# ----------------------------------------------------------------------------
def _supcon_ref(features, labels, temperature=TEMPERATURE,
                base_temperature=BASE_TEMPERATURE):
    f = jnp.asarray(features, jnp.float32)
    f = f.reshape(f.shape[0], -1)
    labels = jnp.asarray(labels).reshape(-1)
    pos = (labels[:, None] == labels[None, :]).astype(jnp.float32)
    sim = jnp.dot(f, f.T, precision=lax.Precision.HIGHEST) / temperature
    logits = sim - jnp.max(sim, axis=1, keepdims=True)
    log_prob = logits - jnp.log(jnp.sum(jnp.exp(logits), axis=1, keepdims=True))
    mlpp = jnp.sum(pos * log_prob, axis=1) / jnp.sum(pos, axis=1)
    return -(temperature / base_temperature) * jnp.mean(mlpp)


if __name__ == "__main__":
    key = jax.random.PRNGKey(0)
    k1, k2, k3, k4 = jax.random.split(key, 4)

    # Batch matches the original script's batch_size=128; small feature dim.
    B, NV, FD = 128, 2, 16                        # flattened D = 32
    feats = jax.random.normal(k1, (B, NV, FD), dtype=jnp.float32)
    nrm = jnp.linalg.norm(feats.reshape(B, -1), axis=1, keepdims=True)
    feats = feats / nrm.reshape(B, 1, 1)          # unit-norm (usual SupCon input)
    labels = jax.random.randint(k2, (B,), 0, 2, dtype=jnp.int32)
    groups = jnp.zeros((B,), dtype=jnp.int32)     # length-checked only
    ref = _supcon_ref(feats, labels)

    # --- test 1: auto tiles, single-column-tile path, f32 --------------------
    loss1 = supcon_loss(feats, labels, groups, compute_dtype=jnp.float32)
    jax.block_until_ready(loss1)
    np.testing.assert_allclose(np.asarray(loss1), np.asarray(ref),
                               rtol=1e-4, atol=1e-4)

    # --- test 2: forced multi-column online-softmax path, f32 ----------------
    loss2 = supcon_loss(feats, labels, groups, block_m=64, block_n=64,
                        compute_dtype=jnp.float32)
    jax.block_until_ready(loss2)
    np.testing.assert_allclose(np.asarray(loss2), np.asarray(ref),
                               rtol=1e-4, atol=1e-4)

    # --- test 3: padded batch (B=10 -> 16), column-mask path, f32 ------------
    B2, NV2, FD2 = 10, 2, 24                      # flattened D = 48 -> padded 128
    feats3 = jax.random.normal(k3, (B2, NV2, FD2), dtype=jnp.float32)
    nrm3 = jnp.linalg.norm(feats3.reshape(B2, -1), axis=1, keepdims=True)
    feats3 = feats3 / nrm3.reshape(B2, 1, 1)
    labels3 = jax.random.randint(k4, (B2,), 0, 2, dtype=jnp.int32)
    groups3 = jnp.zeros((B2,), dtype=jnp.int32)
    loss3 = supcon_loss(feats3, labels3, groups3, compute_dtype=jnp.float32)
    jax.block_until_ready(loss3)
    ref3 = _supcon_ref(feats3, labels3)
    np.testing.assert_allclose(np.asarray(loss3), np.asarray(ref3),
                               rtol=1e-4, atol=1e-4)

    # --- test 4: default bf16 fast path (looser numerics) --------------------
    loss4 = supcon_loss(feats, labels, groups)    # compute_dtype=bfloat16 default
    jax.block_until_ready(loss4)
    np.testing.assert_allclose(np.asarray(loss4), np.asarray(ref),
                               rtol=3e-2, atol=3e-2)

    print("KERNEL_OK")
</pallas_src>

<mosaic_0001>
module attributes {stable_mosaic.version = 11 : i64} {
  func.func @_lse_single_kernel(%arg0: i32, %arg1: memref<128x128xf32, #tpu.memory_space<vmem>>, %arg2: memref<128x128xf32, #tpu.memory_space<vmem>>, %arg3: memref<128x1xf32, #tpu.memory_space<vmem>>) attributes {dimension_semantics = [#tpu.dimension_semantics<parallel>], iteration_bounds = array<i64: 1>, scalar_prefetch = 0 : i64, scratch_operands = 0 : i64, tpu.core_type = #tpu.core_type<tc>, window_params = [{transform_indices = @transform_0, window_bounds = array<i64: 128, 128>}, {pipeline_mode = #tpu.pipeline_mode<synchronous>, transform_indices = @transform_1, window_bounds = array<i64: 128, 128>}, {transform_indices = @transform_2, window_bounds = array<i64: 128, 1>}]} {
    %c0 = arith.constant 0 : index
    %c0_0 = arith.constant 0 : index
    %0 = vector.load %arg1[%c0, %c0_0] : memref<128x128xf32, #tpu.memory_space<vmem>>, vector<128x128xf32>
    %c0_1 = arith.constant 0 : index
    %c0_2 = arith.constant 0 : index
    %1 = vector.load %arg2[%c0_1, %c0_2] : memref<128x128xf32, #tpu.memory_space<vmem>>, vector<128x128xf32>
    %cst = arith.constant dense<0.000000e+00> : vector<128x128xf32>
    %2 = tpu.matmul %0, %1, %cst {dimension_numbers = #tpu.dot_dimension_numbers<[1], [1], [0], [0], [0, 0, 1, 0], [], []>} : vector<128x128xf32>, vector<128x128xf32>, vector<128x128xf32> -> vector<128x128xf32>
    %cst_3 = arith.constant 1.000000e+01 : f32
    %3 = vector.broadcast %cst_3 : f32 to vector<128x128xf32>
    %4 = arith.mulf %2, %3 : vector<128x128xf32>
    %cst_4 = arith.constant dense<0xFF800000> : vector<128xf32>
    %5 = vector.multi_reduction <maximumf>, %4, %cst_4 [1] : vector<128x128xf32> to vector<128xf32>
    %6 = vector.shape_cast %5 : vector<128xf32> to vector<128x1xf32>
    %7 = vector.broadcast %6 : vector<128x1xf32> to vector<128x128xf32>
    %8 = arith.subf %4, %7 : vector<128x128xf32>
    %9 = math.exp %8 : vector<128x128xf32>
    %cst_5 = arith.constant dense<0.000000e+00> : vector<128xf32>
    %10 = vector.multi_reduction <add>, %9, %cst_5 [1] : vector<128x128xf32> to vector<128xf32>
    %11 = vector.shape_cast %10 : vector<128xf32> to vector<128x1xf32>
    %12 = math.log %11 : vector<128x1xf32>
    %13 = arith.addf %6, %12 : vector<128x1xf32>
    %c0_6 = arith.constant 0 : index
    %c0_7 = arith.constant 0 : index
    %14 = vector.load %arg3[%c0_6, %c0_7] : memref<128x1xf32, #tpu.memory_space<vmem>>, vector<128x1xf32>
    tpu.vector_store %arg3[%c0_6, %c0_7], %13 {strides = array<i32>} : memref<128x1xf32, #tpu.memory_space<vmem>>, vector<128x1xf32>,
    return
  }
  func.func @transform_0(%arg0: i32) -> (i32, i32) {
    %c0_i32 = arith.constant 0 : i32
    %c0_i32_0 = arith.constant 0 : i32
    return %arg0, %c0_i32 : i32, i32
  }
  func.func @transform_1(%arg0: i32) -> (i32, i32) {
    %c0_i32 = arith.constant 0 : i32
    %c0_i32_0 = arith.constant 0 : i32
    %c0_i32_1 = arith.constant 0 : i32
    return %c0_i32, %c0_i32_0 : i32, i32
  }
  func.func @transform_2(%arg0: i32) -> (i32, i32) {
    %c0_i32 = arith.constant 0 : i32
    %c0_i32_0 = arith.constant 0 : i32
    return %arg0, %c0_i32 : i32, i32
  }
}

</mosaic_0001>

<llo_original>
// kernel: tpu_custom_call.1
$region0: #{tpu_custom_call.1}
  #allocation0 [shape = 'u32[]', space=smem, size = 0x4, offset = 0x4, fixed_abs, tag = 'smem constant byte address 0x4 - core index']
  #allocation1 [shape = 'u32[144,128]{1,0:T(1,128)}', space=vmem, size = 0x12000, scoped, tag = 'internal scratch']
  %s0 = inlined_call_operand.hbm [shape: f32[128,128], index: 0, kind: input, shape index: {}]
  %s1 = inlined_call_operand.hbm [shape: f32[128,128], index: 1, kind: input, shape index: {}]
  %s2 = inlined_call_operand.vmem [shape: f32[128,1], index: 2, kind: output, shape index: {}]
  %s3 = sld [smem:[#allocation0]]
  $region26: #{tpu_custom_call.1} parent=0
    _
  %s5 = ssub.s32 1, %s3
  %s6 = scalar_select 0, %s5, %s3
  $region1: #{tpu_custom_call.1} parent=0
    #allocation2 [shape = 'u8[65536]{0}', space=vmem, size = 0x10000, scoped, tag = 'input window, operand 0, single buffered']
    #allocation3 [shape = 's32[1]{0}', space=sflag, size = 0x4, scoped, tag = 'scoped memory for tpu_custom_call.1']
    #allocation4 [shape = 'u8[65536]{0}', space=vmem, size = 0x10000, scoped, tag = 'input window, operand 1, single buffered']
    #allocation5 [shape = 's32[1]{0}', space=sflag, size = 0x4, scoped, tag = 'scoped memory for tpu_custom_call.1']
    %7 = vsyncpa [#allocation3], 0
    %8 = vsyncpa [#allocation5], 0
    // Predicated region
    $region2: #{tpu_custom_call.1} parent=1 // pred_check
      _
    $region3: #{tpu_custom_call.1} parent=1 // pred_check_branch
      %10 = sbr.rel (0) target = $region5
    $region4: #{tpu_custom_call.1} parent=1 // pred_region
      %s12 = ssub.s32 2048, 2048
      %13 = vsyncadd [#allocation3], %s12
      %s14 = sshll.u32 [#allocation2], 4
      %s15 = int_to_ptr.vmem [resolvable:$true] %s14
      %20 = dma.hbm_to_vmem [thread:$0]  %s0, 2048, %s15, [#allocation3], 128, 128, 8
    $region5: #{tpu_custom_call.1} parent=1 // pred_fallthru
      _
    // Predicated region
    $region6: #{tpu_custom_call.1} parent=1 // pred_check
      _
    $region7: #{tpu_custom_call.1} parent=1 // pred_check_branch
      %22 = sbr.rel (0) target = $region9
    $region8: #{tpu_custom_call.1} parent=1 // pred_region
      %s24 = ssub.s32 2048, 2048
      %25 = vsyncadd [#allocation5], %s24
      %s26 = sshll.u32 [#allocation4], 4
      %s27 = int_to_ptr.vmem [resolvable:$true] %s26
      %32 = dma.hbm_to_vmem [thread:$0]  %s1, 2048, %s27, [#allocation5], 128, 128, 8
    $region9: #{tpu_custom_call.1} parent=1 // pred_fallthru
      _
    // Predicated region
    $region10: #{tpu_custom_call.1} parent=1 // pred_check
      _
    $region11: #{tpu_custom_call.1} parent=1 // pred_check_branch
      %34 = sbr.rel (0) target = $region13
    $region12: #{tpu_custom_call.1} parent=1 // pred_region
      %35 = dma.done [#allocation3], 2048
    $region13: #{tpu_custom_call.1} parent=1 // pred_fallthru
      _
    // Predicated region
    $region14: #{tpu_custom_call.1} parent=1 // pred_check
      _
    $region15: #{tpu_custom_call.1} parent=1 // pred_check_branch
      %37 = sbr.rel (0) target = $region17
    $region16: #{tpu_custom_call.1} parent=1 // pred_region
      %38 = dma.done [#allocation5], 2048
    $region17: #{tpu_custom_call.1} parent=1 // pred_fallthru
      _
    %v39 = vld [vmem:[#allocation2] sm:$0xff]
    %v40 = vld [vmem:[#allocation2 + $0x8] sm:$0xff]
    %v41 = vld [vmem:[#allocation2 + $0x10] sm:$0xff]
    %v42 = vld [vmem:[#allocation2 + $0x18] sm:$0xff]
    %v43 = vld [vmem:[#allocation2 + $0x20] sm:$0xff]
    %v44 = vld [vmem:[#allocation2 + $0x28] sm:$0xff]
    %v45 = vld [vmem:[#allocation2 + $0x30] sm:$0xff]
    %v46 = vld [vmem:[#allocation2 + $0x38] sm:$0xff]
    %v47 = vld [vmem:[#allocation2 + $0x40] sm:$0xff]
    %v48 = vld [vmem:[#allocation2 + $0x48] sm:$0xff]
    %v49 = vld [vmem:[#allocation2 + $0x50] sm:$0xff]
    %v50 = vld [vmem:[#allocation2 + $0x58] sm:$0xff]
    %v51 = vld [vmem:[#allocation2 + $0x60] sm:$0xff]
    %v52 = vld [vmem:[#allocation2 + $0x68] sm:$0xff]
    %v53 = vld [vmem:[#allocation2 + $0x70] sm:$0xff]
    %v54 = vld [vmem:[#allocation2 + $0x78] sm:$0xff]
    %v55 = vld [vmem:[#allocation4] sm:$0xff]
    %v56 = vld [vmem:[#allocation4 + $0x8] sm:$0xff]
    %v57 = vld [vmem:[#allocation4 + $0x10] sm:$0xff]
    %v58 = vld [vmem:[#allocation4 + $0x18] sm:$0xff]
    %v59 = vld [vmem:[#allocation4 + $0x20] sm:$0xff]
    %v60 = vld [vmem:[#allocation4 + $0x28] sm:$0xff]
    %v61 = vld [vmem:[#allocation4 + $0x30] sm:$0xff]
    %v62 = vld [vmem:[#allocation4 + $0x38] sm:$0xff]
    %v63 = vld [vmem:[#allocation4 + $0x40] sm:$0xff]
    %v64 = vld [vmem:[#allocation4 + $0x48] sm:$0xff]
    %v65 = vld [vmem:[#allocation4 + $0x50] sm:$0xff]
    %v66 = vld [vmem:[#allocation4 + $0x58] sm:$0xff]
    %v67 = vld [vmem:[#allocation4 + $0x60] sm:$0xff]
    %v68 = vld [vmem:[#allocation4 + $0x68] sm:$0xff]
    %v69 = vld [vmem:[#allocation4 + $0x70] sm:$0xff]
    %v70 = vld [vmem:[#allocation4 + $0x78] sm:$0xff]
    %71 = vmatprep.subr.mxu0 0.0
    %72 = vmatpush1.xpose.msra.mxu0 %v55
    %73 = vmatprep.subr.mxu0 0.0
    %74 = vmatpush1.xpose.msra.mxu0 %v56
    %75 = vmatprep.subr.mxu0 0.0
    %76 = vmatpush1.xpose.msra.mxu0 %v57
    %77 = vmatprep.subr.mxu0 0.0
    %78 = vmatpush1.xpose.msra.mxu0 %v58
    %79 = vmatprep.subr.mxu0 0.0
    %80 = vmatpush1.xpose.msra.mxu0 %v59
    %81 = vmatprep.subr.mxu0 0.0
    %82 = vmatpush1.xpose.msra.mxu0 %v60
    %83 = vmatprep.subr.mxu0 0.0
    %84 = vmatpush1.xpose.msra.mxu0 %v61
    %85 = vmatprep.subr.mxu0 0.0
    %86 = vmatpush1.xpose.msra.mxu0 %v62
    %87 = vmatprep.subr.mxu0 0.0
    %88 = vmatpush1.xpose.msra.mxu0 %v63
    %89 = vmatprep.subr.mxu0 0.0
    %90 = vmatpush1.xpose.msra.mxu0 %v64
    %91 = vmatprep.subr.mxu0 0.0
    %92 = vmatpush1.xpose.msra.mxu0 %v65
    %93 = vmatprep.subr.mxu0 0.0
    %94 = vmatpush1.xpose.msra.mxu0 %v66
    %95 = vmatprep.subr.mxu0 0.0
    %96 = vmatpush1.xpose.msra.mxu0 %v67
    %97 = vmatprep.subr.mxu0 0.0
    %98 = vmatpush1.xpose.msra.mxu0 %v68
    %99 = vmatprep.subr.mxu0 0.0
    %100 = vmatpush1.xpose.msra.mxu0 %v69
    %101 = vmatprep.subr.mxu0 0.0
    %102 = vmatpush1.xpose.msra.mxu0 %v70
    %103 = vmatprep.subr.mxu0 0.0
    %104 = vmatpush1.xpose.msra.mxu0 0.0
    %105 = vmatprep.subr.mxu0 0.0
    %106 = vmatpush1.xpose.msra.mxu0 0.0
    %107 = vmatprep.subr.mxu0 0.0
    %108 = vmatpush1.xpose.msra.mxu0 0.0
    %109 = vmatprep.subr.mxu0 0.0
    %110 = vmatpush1.xpose.msra.mxu0 0.0
    %111 = vmatprep.subr.mxu0 0.0
    %112 = vmatpush1.xpose.msra.mxu0 0.0
    %113 = vmatprep.subr.mxu0 0.0
    %114 = vmatpush1.xpose.msra.mxu0 0.0
    %115 = vmatprep.subr.mxu0 0.0
    %116 = vmatpush1.xpose.msra.mxu0 0.0
    %117 = vmatprep.subr.mxu0 0.0
    %118 = vmatpush1.xpose.msra.mxu0 0.0
    %119 = vmatprep.subr.mxu0 0.0
    %120 = vmatpush1.xpose.msra.mxu0 0.0
    %121 = vmatprep.subr.mxu0 0.0
    %122 = vmatpush1.xpose.msra.mxu0 0.0
    %123 = vmatprep.subr.mxu0 0.0
    %124 = vmatpush1.xpose.msra.mxu0 0.0
    %125 = vmatprep.subr.mxu0 0.0
    %126 = vmatpush1.xpose.msra.mxu0 0.0
    %127 = vmatprep.subr.mxu0 0.0
    %128 = vmatpush1.xpose.msra.mxu0 0.0
    %129 = vmatprep.subr.mxu0 0.0
    %130 = vmatpush1.xpose.msra.mxu0 0.0
    %131 = vmatprep.subr.mxu0 0.0
    %132 = vmatpush1.xpose.msra.mxu0 0.0
    %133 = vmatprep.subr.mxu0 0.0
    %134 = vmatpush1.xpose.msra.mxu0 0.0
    %135 = vmatprep.mubr.f32.mxu0 0.0
    %136 = vmatmul.mubr.f32.gmra.mrb[0].mxu0 %v39
    %v137 = vpop.f32.mrb[0].mxu0
    %v138 = vadd.f32 0.0, %v137
    %v139 = vpop.f32.mrb[0].mxu0
    %140 = vmatprep.mubr.f32.mxu0 0.0
    %141 = vmatmul.mubr.f32.gmra.mrb[0].mxu0 %v40
    %v142 = vpop.f32.mrb[0].mxu0
    %v143 = vadd.f32 0.0, %v142
    %v144 = vpop.f32.mrb[0].mxu0
    %145 = vmatprep.mubr.f32.mxu0 0.0
    %146 = vmatmul.mubr.f32.gmra.mrb[0].mxu0 %v41
    %v147 = vpop.f32.mrb[0].mxu0
    %v148 = vadd.f32 0.0, %v147
    %v149 = vpop.f32.mrb[0].mxu0
    %150 = vmatprep.mubr.f32.mxu0 0.0
    %151 = vmatmul.mubr.f32.gmra.mrb[0].mxu0 %v42
    %v152 = vpop.f32.mrb[0].mxu0
    %v153 = vadd.f32 0.0, %v152
    %v154 = vpop.f32.mrb[0].mxu0
    %155 = vmatprep.mubr.f32.mxu0 0.0
    %156 = vmatmul.mubr.f32.gmra.mrb[0].mxu0 %v43
    %v157 = vpop.f32.mrb[0].mxu0
    %v158 = vadd.f32 0.0, %v157
    %v159 = vpop.f32.mrb[0].mxu0
    %160 = vmatprep.mubr.f32.mxu0 0.0
    %161 = vmatmul.mubr.f32.gmra.mrb[0].mxu0 %v44
    %v162 = vpop.f32.mrb[0].mxu0
    %v163 = vadd.f32 0.0, %v162
    %v164 = vpop.f32.mrb[0].mxu0
    %165 = vmatprep.mubr.f32.mxu0 0.0
    %166 = vmatmul.mubr.f32.gmra.mrb[0].mxu0 %v45
    %v167 = vpop.f32.mrb[0].mxu0
    %v168 = vadd.f32 0.0, %v167
    %v169 = vpop.f32.mrb[0].mxu0
    %170 = vmatprep.mubr.f32.mxu0 0.0
    %171 = vmatmul.mubr.f32.gmra.mrb[0].mxu0 %v46
    %v172 = vpop.f32.mrb[0].mxu0
    %v173 = vadd.f32 0.0, %v172
    %v174 = vpop.f32.mrb[0].mxu0
    %175 = vmatprep.mubr.f32.mxu0 0.0
    %176 = vmatmul.mubr.f32.gmra.mrb[0].mxu0 %v47
    %v177 = vpop.f32.mrb[0].mxu0
    %v178 = vadd.f32 0.0, %v177
    %v179 = vpop.f32.mrb[0].mxu0
    %180 = vmatprep.mubr.f32.mxu0 0.0
    %181 = vmatmul.mubr.f32.gmra.mrb[0].mxu0 %v48
    %v182 = vpop.f32.mrb[0].mxu0
    %v183 = vadd.f32 0.0, %v182
    %v184 = vpop.f32.mrb[0].mxu0
    %185 = vmatprep.mubr.f32.mxu0 0.0
    %186 = vmatmul.mubr.f32.gmra.mrb[0].mxu0 %v49
    %v187 = vpop.f32.mrb[0].mxu0
    %v188 = vadd.f32 0.0, %v187
    %v189 = vpop.f32.mrb[0].mxu0
    %190 = vmatprep.mubr.f32.mxu0 0.0
    %191 = vmatmul.mubr.f32.gmra.mrb[0].mxu0 %v50
    %v192 = vpop.f32.mrb[0].mxu0
    %v193 = vadd.f32 0.0, %v192
    %v194 = vpop.f32.mrb[0].mxu0
    %195 = vmatprep.mubr.f32.mxu0 0.0
    %196 = vmatmul.mubr.f32.gmra.mrb[0].mxu0 %v51
    %v197 = vpop.f32.mrb[0].mxu0
    %v198 = vadd.f32 0.0, %v197
    %v199 = vpop.f32.mrb[0].mxu0
    %200 = vmatprep.mubr.f32.mxu0 0.0
    %201 = vmatmul.mubr.f32.gmra.mrb[0].mxu0 %v52
    %v202 = vpop.f32.mrb[0].mxu0
    %v203 = vadd.f32 0.0, %v202
    %v204 = vpop.f32.mrb[0].mxu0
    %205 = vmatprep.mubr.f32.mxu0 0.0
    %206 = vmatmul.mubr.f32.gmra.mrb[0].mxu0 %v53
    %v207 = vpop.f32.mrb[0].mxu0
    %v208 = vadd.f32 0.0, %v207
    %v209 = vpop.f32.mrb[0].mxu0
    %210 = vmatprep.mubr.f32.mxu0 0.0
    %211 = vmatmul.mubr.f32.gmra.mrb[0].mxu0 %v54
    %v212 = vpop.f32.mrb[0].mxu0
    %v213 = vadd.f32 0.0, %v212
    %v214 = vpop.f32.mrb[0].mxu0
    %215 = vdwg.mxu0
    %v216 = vmul.f32 %v138, 10.0
    %v217 = vmul.f32 %v143, 10.0
    %v218 = vmul.f32 %v148, 10.0
    %v219 = vmul.f32 %v153, 10.0
    %v220 = vmul.f32 %v158, 10.0
    %v221 = vmul.f32 %v163, 10.0
    %v222 = vmul.f32 %v168, 10.0
    %v223 = vmul.f32 %v173, 10.0
    %v224 = vmul.f32 %v178, 10.0
    %v225 = vmul.f32 %v183, 10.0
    %v226 = vmul.f32 %v188, 10.0
    %v227 = vmul.f32 %v193, 10.0
    %v228 = vmul.f32 %v198, 10.0
    %v229 = vmul.f32 %v203, 10.0
    %v230 = vmul.f32 %v208, 10.0
    %v231 = vmul.f32 %v213, 10.0
    %232 = vmax.xlane.f32.xlu0 %v216
    %v233 = vpop.xlane.xlu0 %232
    %234 = vmax.xlane.f32.xlu0 %v217
    %v235 = vpop.xlane.xlu0 %234
    %236 = vmax.xlane.f32.xlu0 %v218
    %v237 = vpop.xlane.xlu0 %236
    %238 = vmax.xlane.f32.xlu0 %v219
    %v239 = vpop.xlane.xlu0 %238
    %240 = vmax.xlane.f32.xlu0 %v220
    %v241 = vpop.xlane.xlu0 %240
    %242 = vmax.xlane.f32.xlu0 %v221
    %v243 = vpop.xlane.xlu0 %242
    %244 = vmax.xlane.f32.xlu0 %v222
    %v245 = vpop.xlane.xlu0 %244
    %246 = vmax.xlane.f32.xlu0 %v223
    %v247 = vpop.xlane.xlu0 %246
    %248 = vmax.xlane.f32.xlu0 %v224
    %v249 = vpop.xlane.xlu0 %248
    %250 = vmax.xlane.f32.xlu0 %v225
    %v251 = vpop.xlane.xlu0 %250
    %252 = vmax.xlane.f32.xlu0 %v226
    %v253 = vpop.xlane.xlu0 %252
    %254 = vmax.xlane.f32.xlu0 %v227
    %v255 = vpop.xlane.xlu0 %254
    %256 = vmax.xlane.f32.xlu0 %v228
    %v257 = vpop.xlane.xlu0 %256
    %258 = vmax.xlane.f32.xlu0 %v229
    %v259 = vpop.xlane.xlu0 %258
    %260 = vmax.xlane.f32.xlu0 %v230
    %v261 = vpop.xlane.xlu0 %260
    %262 = vmax.xlane.f32.xlu0 %v231
    %v263 = vpop.xlane.xlu0 %262
    %v264 = vsub.f32 %v216, %v233
    %v265 = vsub.f32 %v217, %v235
    %v266 = vsub.f32 %v218, %v237
    %v267 = vsub.f32 %v219, %v239
    %v268 = vsub.f32 %v220, %v241
    %v269 = vsub.f32 %v221, %v243
    %v270 = vsub.f32 %v222, %v245
    %v271 = vsub.f32 %v223, %v247
    %v272 = vsub.f32 %v224, %v249
    %v273 = vsub.f32 %v225, %v251
    %v274 = vsub.f32 %v226, %v253
    %v275 = vsub.f32 %v227, %v255
    %v276 = vsub.f32 %v228, %v257
    %v277 = vsub.f32 %v229, %v259
    %v278 = vsub.f32 %v230, %v261
    %v279 = vsub.f32 %v231, %v263
    %v280 = vmul.f32 %v264, 1.442695
    %v281 = vpow.pop %v280
    %v282 = vmul.f32 %v265, 1.442695
    %v283 = vpow.pop %v282
    %v284 = vmul.f32 %v266, 1.442695
    %v285 = vpow.pop %v284
    %v286 = vmul.f32 %v267, 1.442695
    %v287 = vpow.pop %v286
    %v288 = vmul.f32 %v268, 1.442695
    %v289 = vpow.pop %v288
    %v290 = vmul.f32 %v269, 1.442695
    %v291 = vpow.pop %v290
    %v292 = vmul.f32 %v270, 1.442695
    %v293 = vpow.pop %v292
    %v294 = vmul.f32 %v271, 1.442695
    %v295 = vpow.pop %v294
    %v296 = vmul.f32 %v272, 1.442695
    %v297 = vpow.pop %v296
    %v298 = vmul.f32 %v273, 1.442695
    %v299 = vpow.pop %v298
    %v300 = vmul.f32 %v274, 1.442695
    %v301 = vpow.pop %v300
    %v302 = vmul.f32 %v275, 1.442695
    %v303 = vpow.pop %v302
    %v304 = vmul.f32 %v276, 1.442695
    %v305 = vpow.pop %v304
    %v306 = vmul.f32 %v277, 1.442695
    %v307 = vpow.pop %v306
    %v308 = vmul.f32 %v278, 1.442695
    %v309 = vpow.pop %v308
    %v310 = vmul.f32 %v279, 1.442695
    %v311 = vpow.pop %v310
    %312 = vadd.xlane.f32.xlu0 %v281
    %v313 = vpop.xlane.xlu0 %312
    %314 = vadd.xlane.f32.xlu0 %v283
    %v315 = vpop.xlane.xlu0 %314
    %316 = vadd.xlane.f32.xlu0 %v285
    %v317 = vpop.xlane.xlu0 %316
    %318 = vadd.xlane.f32.xlu0 %v287
    %v319 = vpop.xlane.xlu0 %318
    %320 = vadd.xlane.f32.xlu0 %v289
    %v321 = vpop.xlane.xlu0 %320
    %322 = vadd.xlane.f32.xlu0 %v291
    %v323 = vpop.xlane.xlu0 %322
    %324 = vadd.xlane.f32.xlu0 %v293
    %v325 = vpop.xlane.xlu0 %324
    %326 = vadd.xlane.f32.xlu0 %v295
    %v327 = vpop.xlane.xlu0 %326
    %328 = vadd.xlane.f32.xlu0 %v297
    %v329 = vpop.xlane.xlu0 %328
    %330 = vadd.xlane.f32.xlu0 %v299
    %v331 = vpop.xlane.xlu0 %330
    %332 = vadd.xlane.f32.xlu0 %v301
    %v333 = vpop.xlane.xlu0 %332
    %334 = vadd.xlane.f32.xlu0 %v303
    %v335 = vpop.xlane.xlu0 %334
    %336 = vadd.xlane.f32.xlu0 %v305
    %v337 = vpop.xlane.xlu0 %336
    %338 = vadd.xlane.f32.xlu0 %v307
    %v339 = vpop.xlane.xlu0 %338
    %340 = vadd.xlane.f32.xlu0 %v309
    %v341 = vpop.xlane.xlu0 %340
    %342 = vadd.xlane.f32.xlu0 %v311
    %v343 = vpop.xlane.xlu0 %342
    %v344 = vlog2.pop %v313
    %v345 = vmul.f32 %v344, 0.6931472
    %v346 = vlog2.pop %v315
    %v347 = vmul.f32 %v346, 0.6931472
    %v348 = vlog2.pop %v317
    %v349 = vmul.f32 %v348, 0.6931472
    %v350 = vlog2.pop %v319
    %v351 = vmul.f32 %v350, 0.6931472
    %v352 = vlog2.pop %v321
    %v353 = vmul.f32 %v352, 0.6931472
    %v354 = vlog2.pop %v323
    %v355 = vmul.f32 %v354, 0.6931472
    %v356 = vlog2.pop %v325
    %v357 = vmul.f32 %v356, 0.6931472
    %v358 = vlog2.pop %v327
    %v359 = vmul.f32 %v358, 0.6931472
    %v360 = vlog2.pop %v329
    %v361 = vmul.f32 %v360, 0.6931472
    %v362 = vlog2.pop %v331
    %v363 = vmul.f32 %v362, 0.6931472
    %v364 = vlog2.pop %v333
    %v365 = vmul.f32 %v364, 0.6931472
    %v366 = vlog2.pop %v335
    %v367 = vmul.f32 %v366, 0.6931472
    %v368 = vlog2.pop %v337
    %v369 = vmul.f32 %v368, 0.6931472
    %v370 = vlog2.pop %v339
    %v371 = vmul.f32 %v370, 0.6931472
    %v372 = vlog2.pop %v341
    %v373 = vmul.f32 %v372, 0.6931472
    %v374 = vlog2.pop %v343
    %v375 = vmul.f32 %v374, 0.6931472
    %v376 = vadd.f32 %v233, %v345
    %v377 = vadd.f32 %v235, %v347
    %v378 = vadd.f32 %v237, %v349
    %v379 = vadd.f32 %v239, %v351
    %v380 = vadd.f32 %v241, %v353
    %v381 = vadd.f32 %v243, %v355
    %v382 = vadd.f32 %v245, %v357
    %v383 = vadd.f32 %v247, %v359
    %v384 = vadd.f32 %v249, %v361
    %v385 = vadd.f32 %v251, %v363
    %v386 = vadd.f32 %v253, %v365
    %v387 = vadd.f32 %v255, %v367
    %v388 = vadd.f32 %v257, %v369
    %v389 = vadd.f32 %v259, %v371
    %v390 = vadd.f32 %v261, %v373
    %v391 = vadd.f32 %v263, %v375
    %vm392 = vcmask 7168
    %393 = vst.msk [vmem:[%s2] sm:$0xff] %vm392, %v376
    %394 = vst.msk [vmem:[%s2 + $0x8] sm:$0xff] %vm392, %v377
    %395 = vst.msk [vmem:[%s2 + $0x10] sm:$0xff] %vm392, %v378
    %396 = vst.msk [vmem:[%s2 + $0x18] sm:$0xff] %vm392, %v379
    %397 = vst.msk [vmem:[%s2 + $0x20] sm:$0xff] %vm392, %v380
    %398 = vst.msk [vmem:[%s2 + $0x28] sm:$0xff] %vm392, %v381
    %399 = vst.msk [vmem:[%s2 + $0x30] sm:$0xff] %vm392, %v382
    %400 = vst.msk [vmem:[%s2 + $0x38] sm:$0xff] %vm392, %v383
    %401 = vst.msk [vmem:[%s2 + $0x40] sm:$0xff] %vm392, %v384
    %402 = vst.msk [vmem:[%s2 + $0x48] sm:$0xff] %vm392, %v385
    %403 = vst.msk [vmem:[%s2 + $0x50] sm:$0xff] %vm392, %v386
    %404 = vst.msk [vmem:[%s2 + $0x58] sm:$0xff] %vm392, %v387
    %405 = vst.msk [vmem:[%s2 + $0x60] sm:$0xff] %vm392, %v388
    %406 = vst.msk [vmem:[%s2 + $0x68] sm:$0xff] %vm392, %v389
    %407 = vst.msk [vmem:[%s2 + $0x70] sm:$0xff] %vm392, %v390
    %408 = vst.msk [vmem:[%s2 + $0x78] sm:$0xff] %vm392, %v391
    // Predicated region
    $region18: #{tpu_custom_call.1} parent=1 // pred_check
      _
    $region19: #{tpu_custom_call.1} parent=1 // pred_check_branch
      %410 = sbr.rel (0) target = $region21
    $region20: #{tpu_custom_call.1} parent=1 // pred_region
      _
    $region21: #{tpu_custom_call.1} parent=1 // pred_fallthru
      _
    // Predicated region
    $region22: #{tpu_custom_call.1} parent=1 // pred_check
      _
    $region23: #{tpu_custom_call.1} parent=1 // pred_check_branch
      %412 = sbr.rel (0) target = $region25
    $region24: #{tpu_custom_call.1} parent=1 // pred_region
      _
    $region25: #{tpu_custom_call.1} parent=1 // pred_fallthru
      _
    %413 = vsyncpa [#allocation3], 1
    %414 = vsyncpa [#allocation5], 1

</llo_original>
